<compile_context>
chip_gen: v7x
topology: tpu7x:2x2x1
jax: 0.10.0
libtpu: 0.0.40
codegen_flags: <defaults>
</compile_context>

<pallas_src>
import functools

import jax
import jax.numpy as jnp
from jax import lax
from jax.experimental import pallas as pl
from jax.experimental.pallas import tpu as pltpu


# ---------------------------------------------------------------------------
# host-side planning helpers
# ---------------------------------------------------------------------------

def _sublane_quantum(dtype):
    itemsize = jnp.dtype(dtype).itemsize
    return max(8, 32 // itemsize)          # 8 for f32, 16 for bf16, 32 for int8


def _vmem_capacity_bytes():
    """Physical VMEM of the current TPU generation (fallback: conservative 64 MiB)."""
    try:
        info = pltpu.get_tpu_info()
        cap = int(getattr(info, "vmem_capacity_bytes", 0) or 0)
        if cap > 0:
            return cap
    except Exception:
        pass
    return 64 << 20


def _pick_block(total, quantum, max_elems):
    """Choose a block size along one dim.

    Returns (block, ragged). `block` is either the full dim (always layout-legal),
    an exact divisor that is a multiple of `quantum`, or -- if neither fits the
    element budget -- a multiple of `quantum` with a ragged trailing tile
    (grid via pl.cdiv; Pallas masks out-of-bounds writes).
    """
    max_elems = max(quantum, max_elems)
    if total <= max_elems:
        return total, False
    best = None
    d = quantum
    while d <= max_elems:
        if total % d == 0:
            best = d
        d += quantum
    if best is not None:
        return best, False
    return (max_elems // quantum) * quantum, True


def _plan_tiles(C, HW, dtype, budget_bytes):
    """Pick (cc, ragged_c, hwc, ragged_hw) so one (1, cc, hwc) X block stays within
    budget_bytes while keeping lanes 128-dense and sublanes quantized."""
    itemsize = jnp.dtype(dtype).itemsize
    sub_q = _sublane_quantum(dtype)
    max_hw = max(128, budget_bytes // (sub_q * itemsize))
    hwc, ragged_hw = _pick_block(HW, 128, max_hw)
    max_cc = max(sub_q, budget_bytes // (hwc * itemsize))
    cc, ragged_c = _pick_block(C, sub_q, max_cc)
    return cc, ragged_c, hwc, ragged_hw


# ---------------------------------------------------------------------------
# shared in-kernel helper: 3x3 "same" conv over the two pooled features + sigmoid
# ---------------------------------------------------------------------------

def _conv3x3_sigmoid(c_max, c_sum, w_ref, b_ref, H, W):
    """c_max / c_sum: (R, H*W) f32 rows.  w_ref: SMEM (18,) f32 taps (avg taps are
    pre-scaled by 1/C on the host), b_ref: SMEM (1,) f32 bias.  Returns (R, H*W) f32."""
    R, HW = c_max.shape
    pos = lax.broadcasted_iota(jnp.int32, (R, HW), 1)
    col = pos % W
    h_ok = {-1: pos >= W, 0: None, 1: pos < (H - 1) * W}
    w_ok = {-1: col >= 1, 0: None, 1: col < (W - 1)}

    # combine the 8 zero-padding boundary masks once; shared by both features
    masks = {}
    for dh in (-1, 0, 1):
        for dw in (-1, 0, 1):
            if dh == 0 and dw == 0:
                continue
            parts = [m for m in (h_ok[dh], w_ok[dw]) if m is not None]
            masks[(dh, dw)] = parts[0] if len(parts) == 1 else (parts[0] & parts[1])

    # one accumulator per feature to shorten the serial VPU dependence chain
    accs = []
    for ci, feat in enumerate((c_max, c_sum)):
        acc = None
        for kh in range(3):
            for kw in range(3):
                dh, dw = kh - 1, kw - 1
                tap_w = w_ref[ci * 9 + kh * 3 + kw]
                if dh == 0 and dw == 0:
                    tap = feat                                   # centre tap: no roll/mask
                else:
                    off = dh * W + dw                            # flat offset of this tap
                    tap = pltpu.roll(feat, shift=(-off) % HW, axis=1)
                    tap = jnp.where(masks[(dh, dw)], tap, 0.0)
                term = tap_w * tap
                acc = term if acc is None else acc + term
        accs.append(acc)
    return jax.nn.sigmoid(accs[0] + accs[1] + b_ref[0])


# ---------------------------------------------------------------------------
# fused path: pool -> conv -> sigmoid -> scale in one kernel (one plane in VMEM)
# ---------------------------------------------------------------------------

def _fused_kernel(w_ref, b_ref, x_ref, o_ref, *, H, W):
    # x_ref / o_ref: (1, C, H*W) blocks; one full batch plane resident in VMEM.
    xf = x_ref[...].astype(jnp.float32)                          # (1, C, HW)
    c_max = jnp.max(xf, axis=1)                                  # (1, HW)
    c_sum = jnp.sum(xf, axis=1)                                  # (1, HW); 1/C in taps
    wt = _conv3x3_sigmoid(c_max, c_sum, w_ref, b_ref, H, W)      # (1, HW) f32
    o_ref[...] = (xf * wt[:, None, :]).astype(o_ref.dtype)


# ---------------------------------------------------------------------------
# streamed path kernels
# ---------------------------------------------------------------------------

def _pool_kernel(x_ref, pmax_ref, psum_ref, *, cc, C, ragged_c):
    # x_ref: (1, cc, hwc).  pmax/psum: (1, 1, hwc) f32 output blocks, resident across
    # the innermost (channel-chunk) grid axis and used directly as accumulators.
    k = pl.program_id(2)
    xf = x_ref[...].astype(jnp.float32)
    if ragged_c:                            # trailing channel chunk is padded: mask it
        ch = lax.broadcasted_iota(jnp.int32, xf.shape, 1) + k * cc
        x_max_in = jnp.where(ch < C, xf, -jnp.inf)
        x_sum_in = jnp.where(ch < C, xf, 0.0)
    else:
        x_max_in = x_sum_in = xf
    blk_max = jnp.max(x_max_in, axis=1)                          # (1, hwc)
    blk_sum = jnp.sum(x_sum_in, axis=1)                          # (1, hwc)

    @pl.when(k == 0)
    def _():
        pmax_ref[0] = blk_max
        psum_ref[0] = blk_sum

    @pl.when(k > 0)
    def _():
        pmax_ref[0] = jnp.maximum(pmax_ref[0], blk_max)
        psum_ref[0] = psum_ref[0] + blk_sum


def _conv_sigmoid_kernel(w_ref, b_ref, pmax_ref, psum_ref, wt_ref, *, H, W):
    # pmax/psum/wt: (1, 1, H*W) blocks (full spatial row so rolls see real neighbours)
    wt_ref[0] = _conv3x3_sigmoid(pmax_ref[0], psum_ref[0], w_ref, b_ref, H, W)


def _scale_kernel(x_ref, wt_ref, o_ref):
    # multiply in f32 and cast once (matches the reference for low-precision inputs)
    o_ref[...] = (x_ref[...].astype(jnp.float32) * wt_ref[...]).astype(o_ref.dtype)


def _run_streamed(x3, w_flat, b_flat, H, W, cap):
    B, C, HW = x3.shape
    dtype = x3.dtype
    budget = 2 << 20                        # ~2 MiB per X block: safe under every
    cc, ragged_c, hwc, _ = _plan_tiles(C, HW, dtype, budget)  # default scoped VMEM
    n_c = pl.cdiv(C, cc)
    n_hw = pl.cdiv(HW, hwc)

    # ---- pass 1: channel max / sum -> two (B, 1, HW) f32 maps -------------------
    pooled_max, pooled_sum = pl.pallas_call(
        functools.partial(_pool_kernel, cc=cc, C=C, ragged_c=ragged_c),
        out_shape=(jax.ShapeDtypeStruct((B, 1, HW), jnp.float32),
                   jax.ShapeDtypeStruct((B, 1, HW), jnp.float32)),
        grid=(B, n_hw, n_c),
        in_specs=[pl.BlockSpec((1, cc, hwc), lambda b, s, k: (b, k, s))],
        out_specs=(pl.BlockSpec((1, 1, hwc), lambda b, s, k: (b, 0, s)),
                   pl.BlockSpec((1, 1, hwc), lambda b, s, k: (b, 0, s))),
        compiler_params=pltpu.CompilerParams(
            dimension_semantics=("parallel", "parallel", "arbitrary")),
    )(x3)

    # ---- pass 1b: tiny conv3x3 + sigmoid epilogue over full-HW rows --------------
    # TODO(synk): for extremely large H*W (single row >> VMEM) this epilogue would
    # need halo'd HW tiling; full rows are assumed to fit here.
    epi_vmem = int(min(0.9 * cap, max(32 << 20, 30 * HW * 4 + (4 << 20))))
    weights = pl.pallas_call(
        functools.partial(_conv_sigmoid_kernel, H=H, W=W),
        out_shape=jax.ShapeDtypeStruct((B, 1, HW), jnp.float32),
        grid_spec=pltpu.PrefetchScalarGridSpec(
            num_scalar_prefetch=0,
            grid=(B,),
            in_specs=[pl.BlockSpec(memory_space=pltpu.SMEM),          # conv taps
                      pl.BlockSpec(memory_space=pltpu.SMEM),          # conv bias
                      pl.BlockSpec((1, 1, HW), lambda b: (b, 0, 0)),
                      pl.BlockSpec((1, 1, HW), lambda b: (b, 0, 0))],
            out_specs=pl.BlockSpec((1, 1, HW), lambda b: (b, 0, 0)),
        ),
        compiler_params=pltpu.CompilerParams(
            dimension_semantics=("parallel",),
            vmem_limit_bytes=epi_vmem),
    )(w_flat, b_flat, pooled_max, pooled_sum)

    # ---- pass 2: out = x * weights; C innermost so the weight tile stays resident -
    out3 = pl.pallas_call(
        _scale_kernel,
        out_shape=jax.ShapeDtypeStruct((B, C, HW), dtype),
        grid=(B, n_hw, n_c),
        in_specs=[pl.BlockSpec((1, cc, hwc), lambda b, s, c: (b, c, s)),
                  pl.BlockSpec((1, 1, hwc), lambda b, s, c: (b, 0, s))],
        out_specs=pl.BlockSpec((1, cc, hwc), lambda b, s, c: (b, c, s)),
        compiler_params=pltpu.CompilerParams(
            dimension_semantics=("parallel", "parallel", "parallel")),
    )(x3, weights)
    return out3


# ---------------------------------------------------------------------------
# public wrapper
# ---------------------------------------------------------------------------

def conv_attention_spatial(x, conv_w, conv_b, *, force_streamed=False):
    """x: (B, C, H, W) NCHW; conv_w: (1, 2, 3, 3) OIHW; conv_b: (1,)."""
    B, C, H, W = x.shape
    HW = H * W
    itemsize = jnp.dtype(x.dtype).itemsize
    x3 = x.reshape(B, C, HW)                  # free reshape of contiguous NCHW

    # conv taps flattened to (18,); 1/C folded into the avg-feature taps so the
    # kernels only ever need a plain channel sum.
    w_flat = jnp.concatenate(
        [conv_w[0, 0].reshape(-1).astype(jnp.float32),
         conv_w[0, 1].reshape(-1).astype(jnp.float32) / C])
    b_flat = conv_b.reshape(-1).astype(jnp.float32)

    cap = _vmem_capacity_bytes()
    plane = C * HW * itemsize
    # fused working set: double-buffered in+out plane, an f32 temp for low-precision
    # inputs, plus the (HW,)-row temporaries of the conv epilogue.
    fused_ws = 4 * plane + (C * HW * 4 if itemsize < 4 else 0) + 32 * HW * 4 + (1 << 20)
    use_fused = (not force_streamed) and (fused_ws <= cap // 2)

    if use_fused:
        vmem_limit = None
        if fused_ws + (8 << 20) > (16 << 20):      # would exceed the smallest default scope
            vmem_limit = int(min(0.9 * cap, max(32 << 20, fused_ws + (16 << 20))))
        out3 = pl.pallas_call(
            functools.partial(_fused_kernel, H=H, W=W),
            out_shape=jax.ShapeDtypeStruct((B, C, HW), x.dtype),
            grid_spec=pltpu.PrefetchScalarGridSpec(
                num_scalar_prefetch=0,
                grid=(B,),
                in_specs=[pl.BlockSpec(memory_space=pltpu.SMEM),   # conv taps
                          pl.BlockSpec(memory_space=pltpu.SMEM),   # conv bias
                          pl.BlockSpec((1, C, HW), lambda b: (b, 0, 0))],
                out_specs=pl.BlockSpec((1, C, HW), lambda b: (b, 0, 0)),
            ),
            compiler_params=pltpu.CompilerParams(
                dimension_semantics=("parallel",),
                vmem_limit_bytes=vmem_limit),
        )(w_flat, b_flat, x3)
    else:
        out3 = _run_streamed(x3, w_flat, b_flat, H, W, cap)

    return out3.reshape(B, C, H, W)


# ---------------------------------------------------------------------------
# plain-JAX reference matching the PyTorch forward
# ---------------------------------------------------------------------------

def reference(x, conv_w, conv_b):
    c_max = jnp.max(x, axis=1, keepdims=True)
    c_avg = jnp.mean(x, axis=1, keepdims=True)
    c = jnp.concatenate([c_max, c_avg], axis=1)            # (B, 2, H, W)
    y = lax.conv_general_dilated(
        c, conv_w, window_strides=(1, 1), padding=((1, 1), (1, 1)),
        dimension_numbers=("NCHW", "OIHW", "NCHW"))
    y = y + conv_b.reshape(1, -1, 1, 1)
    return x * jax.nn.sigmoid(y)


if __name__ == "__main__":
    B, C, H, W = 2, 4, 16, 16
    key = jax.random.PRNGKey(0)
    kx, kw, kb = jax.random.split(key, 3)

    x = jax.random.normal(kx, (B, C, H, W), dtype=jnp.float32)
    # Conv2d(2, 1, kernel_size=3, padding=1): weight (1, 2, 3, 3), bias (1,)
    fan_in = 2 * 3 * 3
    bound = 1.0 / (fan_in ** 0.5)
    conv_w = jax.random.uniform(kw, (1, 2, 3, 3), jnp.float32, -bound, bound)
    conv_b = jax.random.uniform(kb, (1,), jnp.float32, -bound, bound)

    ref = reference(x, conv_w, conv_b)

    # fused single-pass path (taken automatically for small planes)
    out_fused = jax.block_until_ready(conv_attention_spatial(x, conv_w, conv_b))
    assert out_fused.shape == (B, C, H, W)
    assert jnp.allclose(out_fused, ref, atol=1e-5, rtol=1e-5), "fused path mismatch"

    # streamed (pool / conv / scale) path, exercised explicitly
    out_streamed = jax.block_until_ready(
        conv_attention_spatial(x, conv_w, conv_b, force_streamed=True))
    assert jnp.allclose(out_streamed, ref, atol=1e-5, rtol=1e-5), "streamed path mismatch"

    print("KERNEL_OK")
</pallas_src>

<mosaic_0001>
module attributes {stable_mosaic.version = 11 : i64} {
  func.func @_fused_kernel(%arg0: i32, %arg1: memref<18xf32, #tpu.memory_space<smem>>, %arg2: memref<1xf32, #tpu.memory_space<smem>>, %arg3: memref<1x4x256xf32, #tpu.memory_space<vmem>>, %arg4: memref<1x4x256xf32, #tpu.memory_space<vmem>>) attributes {dimension_semantics = [#tpu.dimension_semantics<parallel>], iteration_bounds = array<i64: 2>, scalar_prefetch = 0 : i64, scratch_operands = 0 : i64, tpu.core_type = #tpu.core_type<tc>, window_params = [{transform_indices = @transform_0, window_bounds = array<i64: 18>}, {transform_indices = @transform_1, window_bounds = array<i64: 1>}, {transform_indices = @transform_2, window_bounds = array<i64: 1, 4, 256>}, {transform_indices = @transform_3, window_bounds = array<i64: 1, 4, 256>}]} {
    %c0 = arith.constant 0 : index
    %c0_0 = arith.constant 0 : index
    %c0_1 = arith.constant 0 : index
    %0 = vector.load %arg3[%c0, %c0_0, %c0_1] : memref<1x4x256xf32, #tpu.memory_space<vmem>>, vector<1x4x256xf32>
    %cst = arith.constant dense<0xFF800000> : vector<1x256xf32>
    %1 = vector.multi_reduction <maximumf>, %0, %cst [1] : vector<1x4x256xf32> to vector<1x256xf32>
    %cst_2 = arith.constant dense<0.000000e+00> : vector<1x256xf32>
    %2 = vector.multi_reduction <add>, %0, %cst_2 [1] : vector<1x4x256xf32> to vector<1x256xf32>
    %3 = tpu.iota {dimensions = array<i32: 1>} : vector<1x256xi32>
    %c16_i32 = arith.constant 16 : i32
    %c0_i32 = arith.constant 0 : i32
    %4 = arith.cmpi eq, %c16_i32, %c0_i32 : i32
    %c1_i32 = arith.constant 1 : i32
    %5 = arith.select %4, %c1_i32, %c16_i32 : i32
    %6 = vector.broadcast %5 : i32 to vector<1x256xi32>
    %7 = arith.remsi %3, %6 : vector<1x256xi32>
    %c0_i32_3 = arith.constant 0 : i32
    %8 = vector.broadcast %c0_i32_3 : i32 to vector<1x256xi32>
    %9 = arith.cmpi ne, %7, %8 : vector<1x256xi32>
    %c0_i32_4 = arith.constant 0 : i32
    %10 = vector.broadcast %c0_i32_4 : i32 to vector<1x256xi32>
    %11 = arith.cmpi slt, %7, %10 : vector<1x256xi32>
    %c0_i32_5 = arith.constant 0 : i32
    %12 = arith.cmpi slt, %5, %c0_i32_5 : i32
    %13 = vector.broadcast %12 : i1 to vector<1x256xi1>
    %14 = vector.broadcast %13 : vector<1x256xi1> to vector<1x256xi1>
    %15 = arith.xori %11, %14 : vector<1x256xi1>
    %16 = arith.andi %15, %9 : vector<1x256xi1>
    %17 = vector.broadcast %5 : i32 to vector<1x256xi32>
    %18 = arith.addi %7, %17 : vector<1x256xi32>
    %19 = arith.select %16, %18, %7 : vector<1x256xi1>, vector<1x256xi32>
    %c16_i32_6 = arith.constant 16 : i32
    %20 = vector.broadcast %c16_i32_6 : i32 to vector<1x256xi32>
    %21 = arith.cmpi sge, %3, %20 : vector<1x256xi32>
    %c240_i32 = arith.constant 240 : i32
    %22 = vector.broadcast %c240_i32 : i32 to vector<1x256xi32>
    %23 = arith.cmpi slt, %3, %22 : vector<1x256xi32>
    %c1_i32_7 = arith.constant 1 : i32
    %24 = vector.broadcast %c1_i32_7 : i32 to vector<1x256xi32>
    %25 = arith.cmpi sge, %19, %24 : vector<1x256xi32>
    %c15_i32 = arith.constant 15 : i32
    %26 = vector.broadcast %c15_i32 : i32 to vector<1x256xi32>
    %27 = arith.cmpi slt, %19, %26 : vector<1x256xi32>
    %28 = arith.andi %21, %25 : vector<1x256xi1>
    %29 = arith.andi %21, %27 : vector<1x256xi1>
    %30 = arith.andi %23, %25 : vector<1x256xi1>
    %31 = arith.andi %23, %27 : vector<1x256xi1>
    %c0_8 = arith.constant 0 : index
    %32 = memref.load %arg1[%c0_8] : memref<18xf32, #tpu.memory_space<smem>>
    %c17_i32 = arith.constant 17 : i32
    %33 = tpu.dynamic_rotate %1 by %c17_i32 dim 1 : vector<1x256xf32>, i32 -> vector<1x256xf32>
    %cst_9 = arith.constant 0.000000e+00 : f32
    %34 = vector.broadcast %cst_9 : f32 to vector<1x256xf32>
    %35 = arith.select %28, %33, %34 : vector<1x256xi1>, vector<1x256xf32>
    %36 = vector.broadcast %32 : f32 to vector<1x256xf32>
    %37 = arith.mulf %36, %35 : vector<1x256xf32>
    %c1 = arith.constant 1 : index
    %38 = memref.load %arg1[%c1] : memref<18xf32, #tpu.memory_space<smem>>
    %c16_i32_10 = arith.constant 16 : i32
    %39 = tpu.dynamic_rotate %1 by %c16_i32_10 dim 1 : vector<1x256xf32>, i32 -> vector<1x256xf32>
    %cst_11 = arith.constant 0.000000e+00 : f32
    %40 = vector.broadcast %cst_11 : f32 to vector<1x256xf32>
    %41 = arith.select %21, %39, %40 : vector<1x256xi1>, vector<1x256xf32>
    %42 = vector.broadcast %38 : f32 to vector<1x256xf32>
    %43 = arith.mulf %42, %41 : vector<1x256xf32>
    %44 = arith.addf %37, %43 : vector<1x256xf32>
    %c2 = arith.constant 2 : index
    %45 = memref.load %arg1[%c2] : memref<18xf32, #tpu.memory_space<smem>>
    %c15_i32_12 = arith.constant 15 : i32
    %46 = tpu.dynamic_rotate %1 by %c15_i32_12 dim 1 : vector<1x256xf32>, i32 -> vector<1x256xf32>
    %cst_13 = arith.constant 0.000000e+00 : f32
    %47 = vector.broadcast %cst_13 : f32 to vector<1x256xf32>
    %48 = arith.select %29, %46, %47 : vector<1x256xi1>, vector<1x256xf32>
    %49 = vector.broadcast %45 : f32 to vector<1x256xf32>
    %50 = arith.mulf %49, %48 : vector<1x256xf32>
    %51 = arith.addf %44, %50 : vector<1x256xf32>
    %c3 = arith.constant 3 : index
    %52 = memref.load %arg1[%c3] : memref<18xf32, #tpu.memory_space<smem>>
    %c1_i32_14 = arith.constant 1 : i32
    %53 = tpu.dynamic_rotate %1 by %c1_i32_14 dim 1 : vector<1x256xf32>, i32 -> vector<1x256xf32>
    %cst_15 = arith.constant 0.000000e+00 : f32
    %54 = vector.broadcast %cst_15 : f32 to vector<1x256xf32>
    %55 = arith.select %25, %53, %54 : vector<1x256xi1>, vector<1x256xf32>
    %56 = vector.broadcast %52 : f32 to vector<1x256xf32>
    %57 = arith.mulf %56, %55 : vector<1x256xf32>
    %58 = arith.addf %51, %57 : vector<1x256xf32>
    %c4 = arith.constant 4 : index
    %59 = memref.load %arg1[%c4] : memref<18xf32, #tpu.memory_space<smem>>
    %60 = vector.broadcast %59 : f32 to vector<1x256xf32>
    %61 = arith.mulf %60, %1 : vector<1x256xf32>
    %62 = arith.addf %58, %61 : vector<1x256xf32>
    %c5 = arith.constant 5 : index
    %63 = memref.load %arg1[%c5] : memref<18xf32, #tpu.memory_space<smem>>
    %c255_i32 = arith.constant 255 : i32
    %64 = tpu.dynamic_rotate %1 by %c255_i32 dim 1 : vector<1x256xf32>, i32 -> vector<1x256xf32>
    %cst_16 = arith.constant 0.000000e+00 : f32
    %65 = vector.broadcast %cst_16 : f32 to vector<1x256xf32>
    %66 = arith.select %27, %64, %65 : vector<1x256xi1>, vector<1x256xf32>
    %67 = vector.broadcast %63 : f32 to vector<1x256xf32>
    %68 = arith.mulf %67, %66 : vector<1x256xf32>
    %69 = arith.addf %62, %68 : vector<1x256xf32>
    %c6 = arith.constant 6 : index
    %70 = memref.load %arg1[%c6] : memref<18xf32, #tpu.memory_space<smem>>
    %c241_i32 = arith.constant 241 : i32
    %71 = tpu.dynamic_rotate %1 by %c241_i32 dim 1 : vector<1x256xf32>, i32 -> vector<1x256xf32>
    %cst_17 = arith.constant 0.000000e+00 : f32
    %72 = vector.broadcast %cst_17 : f32 to vector<1x256xf32>
    %73 = arith.select %30, %71, %72 : vector<1x256xi1>, vector<1x256xf32>
    %74 = vector.broadcast %70 : f32 to vector<1x256xf32>
    %75 = arith.mulf %74, %73 : vector<1x256xf32>
    %76 = arith.addf %69, %75 : vector<1x256xf32>
    %c7 = arith.constant 7 : index
    %77 = memref.load %arg1[%c7] : memref<18xf32, #tpu.memory_space<smem>>
    %c240_i32_18 = arith.constant 240 : i32
    %78 = tpu.dynamic_rotate %1 by %c240_i32_18 dim 1 : vector<1x256xf32>, i32 -> vector<1x256xf32>
    %cst_19 = arith.constant 0.000000e+00 : f32
    %79 = vector.broadcast %cst_19 : f32 to vector<1x256xf32>
    %80 = arith.select %23, %78, %79 : vector<1x256xi1>, vector<1x256xf32>
    %81 = vector.broadcast %77 : f32 to vector<1x256xf32>
    %82 = arith.mulf %81, %80 : vector<1x256xf32>
    %83 = arith.addf %76, %82 : vector<1x256xf32>
    %c8 = arith.constant 8 : index
    %84 = memref.load %arg1[%c8] : memref<18xf32, #tpu.memory_space<smem>>
    %c239_i32 = arith.constant 239 : i32
    %85 = tpu.dynamic_rotate %1 by %c239_i32 dim 1 : vector<1x256xf32>, i32 -> vector<1x256xf32>
    %cst_20 = arith.constant 0.000000e+00 : f32
    %86 = vector.broadcast %cst_20 : f32 to vector<1x256xf32>
    %87 = arith.select %31, %85, %86 : vector<1x256xi1>, vector<1x256xf32>
    %88 = vector.broadcast %84 : f32 to vector<1x256xf32>
    %89 = arith.mulf %88, %87 : vector<1x256xf32>
    %90 = arith.addf %83, %89 : vector<1x256xf32>
    %c9 = arith.constant 9 : index
    %91 = memref.load %arg1[%c9] : memref<18xf32, #tpu.memory_space<smem>>
    %c17_i32_21 = arith.constant 17 : i32
    %92 = tpu.dynamic_rotate %2 by %c17_i32_21 dim 1 : vector<1x256xf32>, i32 -> vector<1x256xf32>
    %cst_22 = arith.constant 0.000000e+00 : f32
    %93 = vector.broadcast %cst_22 : f32 to vector<1x256xf32>
    %94 = arith.select %28, %92, %93 : vector<1x256xi1>, vector<1x256xf32>
    %95 = vector.broadcast %91 : f32 to vector<1x256xf32>
    %96 = arith.mulf %95, %94 : vector<1x256xf32>
    %c10 = arith.constant 10 : index
    %97 = memref.load %arg1[%c10] : memref<18xf32, #tpu.memory_space<smem>>
    %c16_i32_23 = arith.constant 16 : i32
    %98 = tpu.dynamic_rotate %2 by %c16_i32_23 dim 1 : vector<1x256xf32>, i32 -> vector<1x256xf32>
    %cst_24 = arith.constant 0.000000e+00 : f32
    %99 = vector.broadcast %cst_24 : f32 to vector<1x256xf32>
    %100 = arith.select %21, %98, %99 : vector<1x256xi1>, vector<1x256xf32>
    %101 = vector.broadcast %97 : f32 to vector<1x256xf32>
    %102 = arith.mulf %101, %100 : vector<1x256xf32>
    %103 = arith.addf %96, %102 : vector<1x256xf32>
    %c11 = arith.constant 11 : index
    %104 = memref.load %arg1[%c11] : memref<18xf32, #tpu.memory_space<smem>>
    %c15_i32_25 = arith.constant 15 : i32
    %105 = tpu.dynamic_rotate %2 by %c15_i32_25 dim 1 : vector<1x256xf32>, i32 -> vector<1x256xf32>
    %cst_26 = arith.constant 0.000000e+00 : f32
    %106 = vector.broadcast %cst_26 : f32 to vector<1x256xf32>
    %107 = arith.select %29, %105, %106 : vector<1x256xi1>, vector<1x256xf32>
    %108 = vector.broadcast %104 : f32 to vector<1x256xf32>
    %109 = arith.mulf %108, %107 : vector<1x256xf32>
    %110 = arith.addf %103, %109 : vector<1x256xf32>
    %c12 = arith.constant 12 : index
    %111 = memref.load %arg1[%c12] : memref<18xf32, #tpu.memory_space<smem>>
    %c1_i32_27 = arith.constant 1 : i32
    %112 = tpu.dynamic_rotate %2 by %c1_i32_27 dim 1 : vector<1x256xf32>, i32 -> vector<1x256xf32>
    %cst_28 = arith.constant 0.000000e+00 : f32
    %113 = vector.broadcast %cst_28 : f32 to vector<1x256xf32>
    %114 = arith.select %25, %112, %113 : vector<1x256xi1>, vector<1x256xf32>
    %115 = vector.broadcast %111 : f32 to vector<1x256xf32>
    %116 = arith.mulf %115, %114 : vector<1x256xf32>
    %117 = arith.addf %110, %116 : vector<1x256xf32>
    %c13 = arith.constant 13 : index
    %118 = memref.load %arg1[%c13] : memref<18xf32, #tpu.memory_space<smem>>
    %119 = vector.broadcast %118 : f32 to vector<1x256xf32>
    %120 = arith.mulf %119, %2 : vector<1x256xf32>
    %121 = arith.addf %117, %120 : vector<1x256xf32>
    %c14 = arith.constant 14 : index
    %122 = memref.load %arg1[%c14] : memref<18xf32, #tpu.memory_space<smem>>
    %c255_i32_29 = arith.constant 255 : i32
    %123 = tpu.dynamic_rotate %2 by %c255_i32_29 dim 1 : vector<1x256xf32>, i32 -> vector<1x256xf32>
    %cst_30 = arith.constant 0.000000e+00 : f32
    %124 = vector.broadcast %cst_30 : f32 to vector<1x256xf32>
    %125 = arith.select %27, %123, %124 : vector<1x256xi1>, vector<1x256xf32>
    %126 = vector.broadcast %122 : f32 to vector<1x256xf32>
    %127 = arith.mulf %126, %125 : vector<1x256xf32>
    %128 = arith.addf %121, %127 : vector<1x256xf32>
    %c15 = arith.constant 15 : index
    %129 = memref.load %arg1[%c15] : memref<18xf32, #tpu.memory_space<smem>>
    %c241_i32_31 = arith.constant 241 : i32
    %130 = tpu.dynamic_rotate %2 by %c241_i32_31 dim 1 : vector<1x256xf32>, i32 -> vector<1x256xf32>
    %cst_32 = arith.constant 0.000000e+00 : f32
    %131 = vector.broadcast %cst_32 : f32 to vector<1x256xf32>
    %132 = arith.select %30, %130, %131 : vector<1x256xi1>, vector<1x256xf32>
    %133 = vector.broadcast %129 : f32 to vector<1x256xf32>
    %134 = arith.mulf %133, %132 : vector<1x256xf32>
    %135 = arith.addf %128, %134 : vector<1x256xf32>
    %c16 = arith.constant 16 : index
    %136 = memref.load %arg1[%c16] : memref<18xf32, #tpu.memory_space<smem>>
    %c240_i32_33 = arith.constant 240 : i32
    %137 = tpu.dynamic_rotate %2 by %c240_i32_33 dim 1 : vector<1x256xf32>, i32 -> vector<1x256xf32>
    %cst_34 = arith.constant 0.000000e+00 : f32
    %138 = vector.broadcast %cst_34 : f32 to vector<1x256xf32>
    %139 = arith.select %23, %137, %138 : vector<1x256xi1>, vector<1x256xf32>
    %140 = vector.broadcast %136 : f32 to vector<1x256xf32>
    %141 = arith.mulf %140, %139 : vector<1x256xf32>
    %142 = arith.addf %135, %141 : vector<1x256xf32>
    %c17 = arith.constant 17 : index
    %143 = memref.load %arg1[%c17] : memref<18xf32, #tpu.memory_space<smem>>
    %c239_i32_35 = arith.constant 239 : i32
    %144 = tpu.dynamic_rotate %2 by %c239_i32_35 dim 1 : vector<1x256xf32>, i32 -> vector<1x256xf32>
    %cst_36 = arith.constant 0.000000e+00 : f32
    %145 = vector.broadcast %cst_36 : f32 to vector<1x256xf32>
    %146 = arith.select %31, %144, %145 : vector<1x256xi1>, vector<1x256xf32>
    %147 = vector.broadcast %143 : f32 to vector<1x256xf32>
    %148 = arith.mulf %147, %146 : vector<1x256xf32>
    %149 = arith.addf %142, %148 : vector<1x256xf32>
    %150 = arith.addf %90, %149 : vector<1x256xf32>
    %c0_37 = arith.constant 0 : index
    %151 = memref.load %arg2[%c0_37] : memref<1xf32, #tpu.memory_space<smem>>
    %152 = vector.broadcast %151 : f32 to vector<1x256xf32>
    %153 = arith.addf %150, %152 : vector<1x256xf32>
    %154 = arith.negf %153 : vector<1x256xf32>
    %155 = math.exp %154 : vector<1x256xf32>
    %cst_38 = arith.constant 1.000000e+00 : f32
    %156 = vector.broadcast %cst_38 : f32 to vector<1x256xf32>
    %157 = arith.addf %156, %155 : vector<1x256xf32>
    %158 = arith.divf %156, %157 : vector<1x256xf32>
    %159 = vector.shape_cast %158 : vector<1x256xf32> to vector<1x1x256xf32>
    %160 = vector.broadcast %159 : vector<1x1x256xf32> to vector<1x4x256xf32>
    %161 = arith.mulf %0, %160 : vector<1x4x256xf32>
    %c0_39 = arith.constant 0 : index
    %c0_40 = arith.constant 0 : index
    %c0_41 = arith.constant 0 : index
    %162 = vector.load %arg4[%c0_39, %c0_40, %c0_41] : memref<1x4x256xf32, #tpu.memory_space<vmem>>, vector<1x4x256xf32>
    tpu.vector_store %arg4[%c0_39, %c0_40, %c0_41], %161 {strides = array<i32>} : memref<1x4x256xf32, #tpu.memory_space<vmem>>, vector<1x4x256xf32>,
    return
  }
  func.func @transform_0(%arg0: i32) -> i32 {
    %c0_i32 = arith.constant 0 : i32
    %c0_i32_0 = arith.constant 0 : i32
    return %c0_i32 : i32
  }
  func.func @transform_1(%arg0: i32) -> i32 {
    %c0_i32 = arith.constant 0 : i32
    %c0_i32_0 = arith.constant 0 : i32
    return %c0_i32 : i32
  }
  func.func @transform_2(%arg0: i32) -> (i32, i32, i32) {
    %c0_i32 = arith.constant 0 : i32
    %c0_i32_0 = arith.constant 0 : i32
    %c0_i32_1 = arith.constant 0 : i32
    return %arg0, %c0_i32, %c0_i32_0 : i32, i32, i32
  }
  func.func @transform_3(%arg0: i32) -> (i32, i32, i32) {
    %c0_i32 = arith.constant 0 : i32
    %c0_i32_0 = arith.constant 0 : i32
    %c0_i32_1 = arith.constant 0 : i32
    return %arg0, %c0_i32, %c0_i32_0 : i32, i32, i32
  }
}

</mosaic_0001>

<llo_original>
// kernel: tpu_custom_call.1
$region0: #{tpu_custom_call.1}
  #allocation0 [shape = 'u32[]', space=smem, size = 0x4, offset = 0x4, fixed_abs, tag = 'smem constant byte address 0x4 - core index']
  #allocation1 [shape = 'u32[144,128]{1,0:T(1,128)}', space=vmem, size = 0x12000, scoped, tag = 'internal scratch']
  #allocation2 [shape = 'f32[1]{0:T(128)S(6)}', space=smem, size = 0x200, scoped, tag = 'scoped memory for tpu_custom_call.1']
  %s0 = inlined_call_operand.vmem [shape: f32[18], index: 0, kind: input, shape index: {}]
  %s1 = inlined_call_operand.<no memory space> [shape: f32[1], index: 1, kind: input, shape index: {}]
  %s2 = inlined_call_operand.hbm [shape: f32[2,4,256], index: 2, kind: input, shape index: {}]
  %s3 = inlined_call_operand.hbm [shape: f32[2,4,256], index: 3, kind: output, shape index: {}]
  %s4 = sld [smem:[#allocation0]]
  $region53: #{tpu_custom_call.1} parent=0
    _
  %s6 = ssub.s32 1, %s4
  %s7 = scalar_select 0, %s6, %s4
  %8 = sst [smem:[#allocation2]] %s1
  $region1: #{tpu_custom_call.1} parent=0
    #allocation3 [shape = 'u8[512]{0}', space=smem, size = 0x200, scoped, tag = 'input window, operand 0, single buffered']
    #allocation4 [shape = 's32[2]{0}', space=sflag, size = 0x8, scoped, tag = 'scoped memory for tpu_custom_call.1']
    #allocation5 [shape = 's32[2]{0}', space=sflag, size = 0x8, scoped, tag = 'scoped memory for tpu_custom_call.1']
    #allocation6 [shape = 's32[2]{0}', space=sflag, size = 0x8, scoped, tag = 'scoped memory for tpu_custom_call.1']
    #allocation7 [shape = 'u8[8192]{0}', space=vmem, size = 0x2000, scoped, tag = 'input window, operand 2']
    #allocation8 [shape = 'u8[8192]{0}', space=vmem, size = 0x2000, scoped, tag = 'output window, operand 0']
    %9 = vsyncpa [#allocation6], 0
    %10 = vsyncpa [#allocation4], 0
    %s11 = scalar_lea.sflag [#allocation4], 1
    %12 = vsyncpa %s11, 0
    %13 = vsyncpa [#allocation5], 0
    %s14 = scalar_lea.sflag [#allocation5], 1
    %15 = vsyncpa %s14, 0
    loop: start=0, step=1, limit=4
    $region2: #{tpu_custom_call.1} parent=1 // loop_pre_header
      _
    $region3: #{tpu_custom_call.1} parent=1 // loop_header
      %s17 = sphi 0, %s21
      %p18 = scmp.ge.s32.totalorder %s17, 4
      %s25 = sphi 0, %s25
      %s27 = sphi 0, %s25
      %s28 = sphi 0, %s27
      %s42 = sphi 0, %s28
      %s46 = sphi 0, %s46
      %s48 = sphi 0, %s46
      %s49 = sphi 0, %s48
      %s63 = sphi 0, %s49
      %s69 = sphi 0, %s71
      %s72 = sphi 0, %s69
      %s73 = sphi 0, %s72
      %s89 = sphi 0, %s73
      %s95 = sphi 0, %s97
      %s98 = sphi 0, %s95
      %s99 = sphi 0, %s98
      %s115 = sphi 0, %s99
    $region4: #{tpu_custom_call.1} parent=1 // loop_header_branch
      %20 = sbr.rel (%p18) target = $region8
    $region5: #{tpu_custom_call.1} parent=1 // loop_body
      %s22 = ssub.s32 %s17, 1
      %s23 = ssub.s32 %s17, 2
      %s24 = sadd.s32 %s17, 1
      %s26 = sadd.s32 %s25, 1
      %p29 = scmp.eq.s32.totalorder %s17, 1
      %p30 = scmp.ne.s32.totalorder %s25, %s27
      %p31 = scmp.eq.s32.totalorder %s17, 0
      %p32 = por %p30, %p31
      %p33 = scmp.ne.s32.totalorder %s25, %s27
      %p34 = scmp.eq.s32.totalorder %s22, 1
      %p35 = por %p33, %p34
      %p36 = scmp.ne.s32.totalorder %s27, %s28
      %p37 = scmp.eq.s32.totalorder %s22, 0
      %p38 = por %p36, %p37
      %p39 = scmp.ne.s32.totalorder %s27, %s28
      %p40 = scmp.eq.s32.totalorder %s23, 1
      %p41 = por %p39, %p40
      %p43 = scmp.ne.s32.totalorder %s28, %s42
      %p44 = scmp.eq.s32.totalorder %s23, 0
      %p45 = por %p43, %p44
      %s47 = sadd.s32 %s46, 1
      %p50 = scmp.eq.s32.totalorder %s17, 1
      %p51 = scmp.ne.s32.totalorder %s46, %s48
      %p52 = scmp.eq.s32.totalorder %s17, 0
      %p53 = por %p51, %p52
      %p54 = scmp.ne.s32.totalorder %s46, %s48
      %p55 = scmp.eq.s32.totalorder %s22, 1
      %p56 = por %p54, %p55
      %p57 = scmp.ne.s32.totalorder %s48, %s49
      %p58 = scmp.eq.s32.totalorder %s22, 0
      %p59 = por %p57, %p58
      %p60 = scmp.ne.s32.totalorder %s48, %s49
      %p61 = scmp.eq.s32.totalorder %s23, 1
      %p62 = por %p60, %p61
      %p64 = scmp.ne.s32.totalorder %s49, %s63
      %p65 = scmp.eq.s32.totalorder %s23, 0
      %p66 = por %p64, %p65
      %s67 = ssub.s32 %s17, %s24
      %p68 = scmp.eq.s32.totalorder %s67, 0
      %s70 = sadd.s32 %s69, 1
      %s71 = scalar_select %p68, %s69, %s70
      %p74 = pneg %p68
      %p75 = scmp.eq.s32.totalorder %s17, 1
      %p76 = por %p74, %p75
      %p77 = scmp.ne.s32.totalorder %s69, %s72
      %p78 = scmp.eq.s32.totalorder %s17, 0
      %p79 = por %p77, %p78
      %p80 = scmp.ne.s32.totalorder %s69, %s72
      %p81 = scmp.eq.s32.totalorder %s22, 1
      %p82 = por %p80, %p81
      %p83 = scmp.ne.s32.totalorder %s72, %s73
      %p84 = scmp.eq.s32.totalorder %s22, 0
      %p85 = por %p83, %p84
      %p86 = scmp.ne.s32.totalorder %s72, %s73
      %p87 = scmp.eq.s32.totalorder %s23, 1
      %p88 = por %p86, %p87
      %p90 = scmp.ne.s32.totalorder %s73, %s89
      %p91 = scmp.eq.s32.totalorder %s23, 0
      %p92 = por %p90, %p91
      %s93 = ssub.s32 %s17, %s24
      %p94 = scmp.eq.s32.totalorder %s93, 0
      %s96 = sadd.s32 %s95, 1
      %s97 = scalar_select %p94, %s95, %s96
      %p100 = pneg %p94
      %p101 = scmp.eq.s32.totalorder %s17, 1
      %p102 = por %p100, %p101
      %p103 = scmp.ne.s32.totalorder %s95, %s98
      %p104 = scmp.eq.s32.totalorder %s17, 0
      %p105 = por %p103, %p104
      %p106 = scmp.ne.s32.totalorder %s95, %s98
      %p107 = scmp.eq.s32.totalorder %s22, 1
      %p108 = por %p106, %p107
      %p109 = scmp.ne.s32.totalorder %s98, %s99
      %p110 = scmp.eq.s32.totalorder %s22, 0
      %p111 = por %p109, %p110
      %p112 = scmp.ne.s32.totalorder %s98, %s99
      %p113 = scmp.eq.s32.totalorder %s23, 1
      %p114 = por %p112, %p113
      %p116 = scmp.ne.s32.totalorder %s99, %s115
      %p117 = scmp.eq.s32.totalorder %s23, 0
      %p118 = por %p116, %p117
      %p119 = scmp.le.s32.totalorder 1, %s17
      %p120 = scmp.lt.s32.totalorder %s17, 3
      %p121 = pnand %p119, %p120
      %p122 = pneg %p121
      // Predicated region
      $region9: #{tpu_custom_call.1} parent=5 // pred_check
        _
      $region10: #{tpu_custom_call.1} parent=5 // pred_check_branch
        %124 = sbr.rel (%p121) target = $region12
      $region11: #{tpu_custom_call.1} parent=5 // pred_region
        %s125 = ssub.s32 %s17, 1
        // Predicated region
        $region13: #{tpu_custom_call.1} parent=11 // pred_check
          %p126 = pneg %p38
        $region14: #{tpu_custom_call.1} parent=11 // pred_check_branch
          %128 = sbr.rel (%p126) target = $region16
        $region15: #{tpu_custom_call.1} parent=11 // pred_region
          %s130 = ssub.s32 16, 16
          %131 = vsyncadd [#allocation6], %s130
          %s133 = sshll.u32 %s0, 4
          %s134 = int_to_ptr.vmem [resolvable:$true] %s133
          %136 = dma.vmem_to_smem %s134, 16, [#allocation3], [#allocation6]
        $region16: #{tpu_custom_call.1} parent=11 // pred_fallthru
          _
        // Predicated region
        $region17: #{tpu_custom_call.1} parent=11 // pred_check
          %p137 = pneg %p59
        $region18: #{tpu_custom_call.1} parent=11 // pred_check_branch
          %139 = sbr.rel (%p137) target = $region20
        $region19: #{tpu_custom_call.1} parent=11 // pred_region
          _
        $region20: #{tpu_custom_call.1} parent=11 // pred_fallthru
          _
      $region12: #{tpu_custom_call.1} parent=5 // pred_fallthru
        _
      %p140 = scmp.lt.s32.totalorder %s17, 2
      // Predicated region
      $region21: #{tpu_custom_call.1} parent=5 // pred_check
        %p141 = pneg %p140
      $region22: #{tpu_custom_call.1} parent=5 // pred_check_branch
        %143 = sbr.rel (%p141) target = $region24
      $region23: #{tpu_custom_call.1} parent=5 // pred_region
        // Predicated region
        $region25: #{tpu_custom_call.1} parent=23 // pred_check
          %p144 = pneg %p79
        $region26: #{tpu_custom_call.1} parent=23 // pred_check_branch
          %146 = sbr.rel (%p144) target = $region28
        $region27: #{tpu_custom_call.1} parent=23 // pred_region
          %s147 = sand.u32 %s69, 1
          %s148 = scalar_lea.sflag [#allocation4], %s147
          %s149 = sand.u32 %s69, 1
          %s150 = smul.addr %s149, 8
          %s151 = scalar_lea.vmem [#allocation7], %s150
          %s153 = ssub.s32 128, 128
          %154 = vsyncadd %s148, %s153
          %s155 = smul.addr %s17, 2
          %s156 = smul.addr %s155, 64
          %s157 = scalar_lea.hbm %s2, %s156
          %s159 = sshll.u32 %s151, 4
          %s160 = int_to_ptr.vmem [resolvable:$true] %s159
          %162 = dma.hbm_to_vmem [thread:$0]  %s157, 128, %s160, %s148
        $region28: #{tpu_custom_call.1} parent=23 // pred_fallthru
          _
      $region24: #{tpu_custom_call.1} parent=5 // pred_fallthru
        _
      %p163 = scmp.le.s32.totalorder 1, %s17
      %p164 = scmp.lt.s32.totalorder %s17, 3
      %p165 = pnand %p163, %p164
      %p166 = pneg %p165
      // Predicated region
      $region29: #{tpu_custom_call.1} parent=5 // pred_check
        _
      $region30: #{tpu_custom_call.1} parent=5 // pred_check_branch
        %168 = sbr.rel (%p165) target = $region32
      $region31: #{tpu_custom_call.1} parent=5 // pred_region
        %s169 = ssub.s32 %s17, 1
        // Predicated region
        $region33: #{tpu_custom_call.1} parent=31 // pred_check
          %p170 = pneg %p38
        $region34: #{tpu_custom_call.1} parent=31 // pred_check_branch
          %172 = sbr.rel (%p170) target = $region36
        $region35: #{tpu_custom_call.1} parent=31 // pred_region
          %173 = dma.done [#allocation6], 16
        $region36: #{tpu_custom_call.1} parent=31 // pred_fallthru
          _
        %s174 = sand.u32 %s72, 1
        %s175 = scalar_lea.sflag [#allocation4], %s174
        %s176 = sand.u32 %s72, 1
        %s177 = smul.addr %s176, 8
        %s178 = scalar_lea.vmem [#allocation7], %s177
        // Predicated region
        $region37: #{tpu_custom_call.1} parent=31 // pred_check
          %p179 = pneg %p85
        $region38: #{tpu_custom_call.1} parent=31 // pred_check_branch
          %181 = sbr.rel (%p179) target = $region40
        $region39: #{tpu_custom_call.1} parent=31 // pred_region
          %182 = dma.done %s175, 128
        $region40: #{tpu_custom_call.1} parent=31 // pred_fallthru
          _
        %183 = sfence
        %p184 = pneg %p38
        %p185 = pneg %p35
        %p186 = pneg %p59
        %p187 = pneg %p56
        %s188 = sand.u32 %s72, 1
        %s189 = scalar_lea.sflag [#allocation4], %s188
        %s190 = sand.u32 %s72, 1
        %s191 = smul.addr %s190, 8
        %s192 = scalar_lea.vmem [#allocation7], %s191
        %p193 = pneg %p85
        %p194 = pneg %p82
        %p195 = pneg %p111
        %p196 = pneg %p108
        %s197 = sand.u32 %s98, 1
        %s198 = scalar_lea.sflag [#allocation5], %s197
        %s199 = sand.u32 %s98, 1
        %s200 = smul.addr %s199, 8
        %s201 = scalar_lea.vmem [#allocation8], %s200
        %v202 = vld [vmem:[%s178] sm:$0xff]
        %v204 = vcombine.high %v202, %v202
        %vm206 = vcmask 1043456
        %v207 = vsel %vm206, %v202, -inf
        %v208 = vrot.slane %v207, 4
        %v209 = vmax.f32 %v207, %v208
        %v210 = vrot.slane %v209, 2
        %v211 = vmax.f32 %v209, %v210
        %v212 = vrot.slane %v211, 1
        %v213 = vmax.f32 %v211, %v212
        %v214 = vsel %vm206, %v204, -inf
        %v215 = vrot.slane %v214, 4
        %v216 = vmax.f32 %v214, %v215
        %v217 = vrot.slane %v216, 2
        %v218 = vmax.f32 %v216, %v217
        %v219 = vrot.slane %v218, 1
        %v220 = vmax.f32 %v218, %v219
        %v221 = vsel %vm206, %v202, 0.0
        %v222 = vrot.slane %v221, 4
        %v223 = vadd.f32 %v221, %v222
        %v224 = vrot.slane %v223, 2
        %v225 = vadd.f32 %v223, %v224
        %v226 = vrot.slane %v225, 1
        %v227 = vadd.f32 %v225, %v226
        %v228 = vsel %vm206, %v204, 0.0
        %v229 = vrot.slane %v228, 4
        %v230 = vadd.f32 %v228, %v229
        %v231 = vrot.slane %v230, 2
        %v232 = vadd.f32 %v230, %v231
        %v233 = vrot.slane %v232, 1
        %v234 = vadd.f32 %v232, %v233
        %v235 = vlaneseq
        %v236 = vand.u32 %v235, 127
        %v237 = vadd.s32 %v236, 128
        %vm238 = vcmp.lt.s32.totalorder %v236, 0
        %v239 = vsub.s32 0, %v236
        %v240 = vsel %vm238, %v239, %v236
        %v241 = vshrl.u32 %v240, 4
        %v242 = vand.u32 %v240, 15
        %v243 = vsub.s32 0, %v242
        %v244 = vsel %vm238, %v243, %v242
        %vm245 = vcmp.lt.s32.totalorder %v237, 0
        %v246 = vsub.s32 0, %v237
        %v247 = vsel %vm245, %v246, %v237
        %v248 = vshrl.u32 %v247, 4
        %v249 = vand.u32 %v247, 15
        %v250 = vsub.s32 0, %v249
        %v251 = vsel %vm245, %v250, %v249
        %vm252 = vcmp.ne.s32.totalorder %v244, 0
        %vm253 = vcmp.ne.s32.totalorder %v251, 0
        %vm254 = vcmp.lt.s32.totalorder %v244, 0
        %vm255 = vcmp.lt.s32.totalorder %v251, 0
        %vm256 = vmand %vm254, %vm252
        %vm257 = vmand %vm255, %vm253
        %v258 = vadd.s32 %v244, 16
        %v259 = vadd.s32 %v251, 16
        %v260 = vsel %vm256, %v258, %v244
        %v261 = vsel %vm257, %v259, %v251
        %vm262 = vcmp.ge.s32.totalorder %v236, 16
        %vm263 = vcmp.ge.s32.totalorder %v237, 16
        %vm264 = vcmp.lt.s32.totalorder %v236, 240
        %vm265 = vcmp.lt.s32.totalorder %v237, 240
        %vm266 = vcmp.ge.s32.totalorder %v260, 1
        %vm267 = vcmp.ge.s32.totalorder %v261, 1
        %vm268 = vcmp.lt.s32.totalorder %v260, 15
        %vm269 = vcmp.lt.s32.totalorder %v261, 15
        %vm270 = vmand %vm262, %vm266
        %vm271 = vmand %vm263, %vm267
        %vm272 = vmand %vm262, %vm268
        %vm273 = vmand %vm263, %vm269
        %vm274 = vmand %vm264, %vm266
        %vm275 = vmand %vm265, %vm267
        %vm276 = vmand %vm264, %vm268
        %vm277 = vmand %vm265, %vm269
        %s278 = sld [smem:[#allocation3]]
        %279 = vrot.lane.b32.xlu0 %v213, 17
        %v280 = vpop.permute.xlu0 %279
        %281 = vrot.lane.b32.xlu0 %v220, 17
        %v282 = vpop.permute.xlu0 %281
        %vm283 = vcmp.lt.s32.totalorder %v236, 17
        %v284 = vsel %vm283, %v280, %v282
        %v285 = vsel %vm283, %v282, %v280
        %v286 = vsel %vm270, %v285, 0.0
        %v287 = vsel %vm271, %v284, 0.0
        %v288 = vstv %s278
        %v289 = vmul.f32 %v288, %v286
        %v290 = vmul.f32 %v288, %v287
        %s291 = sld [smem:[#allocation3 + $0x1]]
        %292 = vrot.lane.b32.xlu0 %v213, 16
        %v293 = vpop.permute.xlu0 %292
        %294 = vrot.lane.b32.xlu0 %v220, 16
        %v295 = vpop.permute.xlu0 %294
        %vm296 = vcmp.lt.s32.totalorder %v236, 16
        %v297 = vsel %vm296, %v293, %v295
        %v298 = vsel %vm296, %v295, %v293
        %v299 = vsel %vm262, %v298, 0.0
        %v300 = vsel %vm263, %v297, 0.0
        %v301 = vstv %s291
        %v302 = vmul.f32 %v301, %v299
        %v303 = vmul.f32 %v301, %v300
        %v304 = vadd.f32 %v289, %v302
        %v305 = vadd.f32 %v290, %v303
        %s306 = sld [smem:[#allocation3 + $0x2]]
        %307 = vrot.lane.b32.xlu0 %v213, 15
        %v308 = vpop.permute.xlu0 %307
        %309 = vrot.lane.b32.xlu0 %v220, 15
        %v310 = vpop.permute.xlu0 %309
        %vm311 = vcmp.lt.s32.totalorder %v236, 15
        %v312 = vsel %vm311, %v308, %v310
        %v313 = vsel %vm311, %v310, %v308
        %v314 = vsel %vm272, %v313, 0.0
        %v315 = vsel %vm273, %v312, 0.0
        %v316 = vstv %s306
        %v317 = vmul.f32 %v316, %v314
        %v318 = vmul.f32 %v316, %v315
        %v319 = vadd.f32 %v304, %v317
        %v320 = vadd.f32 %v305, %v318
        %s321 = sld [smem:[#allocation3 + $0x3]]
        %322 = vrot.lane.b32.xlu0 %v213, 1
        %v323 = vpop.permute.xlu0 %322
        %324 = vrot.lane.b32.xlu0 %v220, 1
        %v325 = vpop.permute.xlu0 %324
        %vm326 = vcmp.lt.s32.totalorder %v236, 1
        %v327 = vsel %vm326, %v323, %v325
        %v328 = vsel %vm326, %v325, %v323
        %v329 = vsel %vm266, %v328, 0.0
        %v330 = vsel %vm267, %v327, 0.0
        %v331 = vstv %s321
        %v332 = vmul.f32 %v331, %v329
        %v333 = vmul.f32 %v331, %v330
        %v334 = vadd.f32 %v319, %v332
        %v335 = vadd.f32 %v320, %v333
        %s336 = sld [smem:[#allocation3 + $0x4]]
        %v337 = vstv %s336
        %v338 = vmul.f32 %v337, %v213
        %v339 = vmul.f32 %v337, %v220
        %v340 = vadd.f32 %v334, %v338
        %v341 = vadd.f32 %v335, %v339
        %s342 = sld [smem:[#allocation3 + $0x5]]
        %343 = vrot.lane.b32.xlu0 %v213, 127
        %v344 = vpop.permute.xlu0 %343
        %345 = vrot.lane.b32.xlu0 %v220, 127
        %v346 = vpop.permute.xlu0 %345
        %vm347 = vcmp.lt.s32.totalorder %v236, 127
        %v348 = vsel %vm347, %v344, %v346
        %v349 = vsel %vm347, %v346, %v344
        %v350 = vsel %vm268, %v348, 0.0
        %v351 = vsel %vm269, %v349, 0.0
        %v352 = vstv %s342
        %v353 = vmul.f32 %v352, %v350
        %v354 = vmul.f32 %v352, %v351
        %v355 = vadd.f32 %v340, %v353
        %v356 = vadd.f32 %v341, %v354
        %s357 = sld [smem:[#allocation3 + $0x6]]
        %358 = vrot.lane.b32.xlu0 %v213, 113
        %v359 = vpop.permute.xlu0 %358
        %360 = vrot.lane.b32.xlu0 %v220, 113
        %v361 = vpop.permute.xlu0 %360
        %vm362 = vcmp.lt.s32.totalorder %v236, 113
        %v363 = vsel %vm362, %v359, %v361
        %v364 = vsel %vm362, %v361, %v359
        %v365 = vsel %vm274, %v363, 0.0
        %v366 = vsel %vm275, %v364, 0.0
        %v367 = vstv %s357
        %v368 = vmul.f32 %v367, %v365
        %v369 = vmul.f32 %v367, %v366
        %v370 = vadd.f32 %v355, %v368
        %v371 = vadd.f32 %v356, %v369
        %s372 = sld [smem:[#allocation3 + $0x7]]
        %373 = vrot.lane.b32.xlu0 %v213, 112
        %v374 = vpop.permute.xlu0 %373
        %375 = vrot.lane.b32.xlu0 %v220, 112
        %v376 = vpop.permute.xlu0 %375
        %vm377 = vcmp.lt.s32.totalorder %v236, 112
        %v378 = vsel %vm377, %v374, %v376
        %v379 = vsel %vm377, %v376, %v374
        %v380 = vsel %vm264, %v378, 0.0
        %v381 = vsel %vm265, %v379, 0.0
        %v382 = vstv %s372
        %v383 = vmul.f32 %v382, %v380
        %v384 = vmul.f32 %v382, %v381
        %v385 = vadd.f32 %v370, %v383
        %v386 = vadd.f32 %v371, %v384
        %s387 = sld [smem:[#allocation3 + $0x8]]
        %388 = vrot.lane.b32.xlu0 %v213, 111
        %v389 = vpop.permute.xlu0 %388
        %390 = vrot.lane.b32.xlu0 %v220, 111
        %v391 = vpop.permute.xlu0 %390
        %vm392 = vcmp.lt.s32.totalorder %v236, 111
        %v393 = vsel %vm392, %v389, %v391
        %v394 = vsel %vm392, %v391, %v389
        %v395 = vsel %vm276, %v393, 0.0
        %v396 = vsel %vm277, %v394, 0.0
        %v397 = vstv %s387
        %v398 = vmul.f32 %v397, %v395
        %v399 = vmul.f32 %v397, %v396
        %v400 = vadd.f32 %v385, %v398
        %v401 = vadd.f32 %v386, %v399
        %s402 = sld [smem:[#allocation3 + $0x9]]
        %403 = vrot.lane.b32.xlu0 %v227, 17
        %v404 = vpop.permute.xlu0 %403
        %405 = vrot.lane.b32.xlu0 %v234, 17
        %v406 = vpop.permute.xlu0 %405
        %v407 = vsel %vm283, %v404, %v406
        %v408 = vsel %vm283, %v406, %v404
        %v409 = vsel %vm270, %v408, 0.0
        %v410 = vsel %vm271, %v407, 0.0
        %v411 = vstv %s402
        %v412 = vmul.f32 %v411, %v409
        %v413 = vmul.f32 %v411, %v410
        %s414 = sld [smem:[#allocation3 + $0xa]]
        %415 = vrot.lane.b32.xlu0 %v227, 16
        %v416 = vpop.permute.xlu0 %415
        %417 = vrot.lane.b32.xlu0 %v234, 16
        %v418 = vpop.permute.xlu0 %417
        %v419 = vsel %vm296, %v416, %v418
        %v420 = vsel %vm296, %v418, %v416
        %v421 = vsel %vm262, %v420, 0.0
        %v422 = vsel %vm263, %v419, 0.0
        %v423 = vstv %s414
        %v424 = vmul.f32 %v423, %v421
        %v425 = vmul.f32 %v423, %v422
        %v426 = vadd.f32 %v412, %v424
        %v427 = vadd.f32 %v413, %v425
        %s428 = sld [smem:[#allocation3 + $0xb]]
        %429 = vrot.lane.b32.xlu0 %v227, 15
        %v430 = vpop.permute.xlu0 %429
        %431 = vrot.lane.b32.xlu0 %v234, 15
        %v432 = vpop.permute.xlu0 %431
        %v433 = vsel %vm311, %v430, %v432
        %v434 = vsel %vm311, %v432, %v430
        %v435 = vsel %vm272, %v434, 0.0
        %v436 = vsel %vm273, %v433, 0.0
        %v437 = vstv %s428
        %v438 = vmul.f32 %v437, %v435
        %v439 = vmul.f32 %v437, %v436
        %v440 = vadd.f32 %v426, %v438
        %v441 = vadd.f32 %v427, %v439
        %s442 = sld [smem:[#allocation3 + $0xc]]
        %443 = vrot.lane.b32.xlu0 %v227, 1
        %v444 = vpop.permute.xlu0 %443
        %445 = vrot.lane.b32.xlu0 %v234, 1
        %v446 = vpop.permute.xlu0 %445
        %v447 = vsel %vm326, %v444, %v446
        %v448 = vsel %vm326, %v446, %v444
        %v449 = vsel %vm266, %v448, 0.0
        %v450 = vsel %vm267, %v447, 0.0
        %v451 = vstv %s442
        %v452 = vmul.f32 %v451, %v449
        %v453 = vmul.f32 %v451, %v450
        %v454 = vadd.f32 %v440, %v452
        %v455 = vadd.f32 %v441, %v453
        %s456 = sld [smem:[#allocation3 + $0xd]]
        %v457 = vstv %s456
        %v458 = vmul.f32 %v457, %v227
        %v459 = vmul.f32 %v457, %v234
        %v460 = vadd.f32 %v454, %v458
        %v461 = vadd.f32 %v455, %v459
        %s462 = sld [smem:[#allocation3 + $0xe]]
        %463 = vrot.lane.b32.xlu0 %v227, 127
        %v464 = vpop.permute.xlu0 %463
        %465 = vrot.lane.b32.xlu0 %v234, 127
        %v466 = vpop.permute.xlu0 %465
        %v467 = vsel %vm347, %v464, %v466
        %v468 = vsel %vm347, %v466, %v464
        %v469 = vsel %vm268, %v467, 0.0
        %v470 = vsel %vm269, %v468, 0.0
        %v471 = vstv %s462
        %v472 = vmul.f32 %v471, %v469
        %v473 = vmul.f32 %v471, %v470
        %v474 = vadd.f32 %v460, %v472
        %v475 = vadd.f32 %v461, %v473
        %s476 = sld [smem:[#allocation3 + $0xf]]
        %477 = vrot.lane.b32.xlu0 %v227, 113
        %v478 = vpop.permute.xlu0 %477
        %479 = vrot.lane.b32.xlu0 %v234, 113
        %v480 = vpop.permute.xlu0 %479
        %v481 = vsel %vm362, %v478, %v480
        %v482 = vsel %vm362, %v480, %v478
        %v483 = vsel %vm274, %v481, 0.0
        %v484 = vsel %vm275, %v482, 0.0
        %v485 = vstv %s476
        %v486 = vmul.f32 %v485, %v483
        %v487 = vmul.f32 %v485, %v484
        %v488 = vadd.f32 %v474, %v486
        %v489 = vadd.f32 %v475, %v487
        %s490 = sld [smem:[#allocation3 + $0x10]]
        %491 = vrot.lane.b32.xlu0 %v227, 112
        %v492 = vpop.permute.xlu0 %491
        %493 = vrot.lane.b32.xlu0 %v234, 112
        %v494 = vpop.permute.xlu0 %493
        %v495 = vsel %vm377, %v492, %v494
        %v496 = vsel %vm377, %v494, %v492
        %v497 = vsel %vm264, %v495, 0.0
        %v498 = vsel %vm265, %v496, 0.0
        %v499 = vstv %s490
        %v500 = vmul.f32 %v499, %v497
        %v501 = vmul.f32 %v499, %v498
        %v502 = vadd.f32 %v488, %v500
        %v503 = vadd.f32 %v489, %v501
        %s504 = sld [smem:[#allocation3 + $0x11]]
        %505 = vrot.lane.b32.xlu0 %v227, 111
        %v506 = vpop.permute.xlu0 %505
        %507 = vrot.lane.b32.xlu0 %v234, 111
        %v508 = vpop.permute.xlu0 %507
        %v509 = vsel %vm392, %v506, %v508
        %v510 = vsel %vm392, %v508, %v506
        %v511 = vsel %vm276, %v509, 0.0
        %v512 = vsel %vm277, %v510, 0.0
        %v513 = vstv %s504
        %v514 = vmul.f32 %v513, %v511
        %v515 = vmul.f32 %v513, %v512
        %v516 = vadd.f32 %v502, %v514
        %v517 = vadd.f32 %v503, %v515
        %v518 = vadd.f32 %v400, %v516
        %v519 = vadd.f32 %v401, %v517
        %s520 = sld [smem:[#allocation2]]
        %v521 = vstv %s520
        %v522 = vadd.f32 %v518, %v521
        %v523 = vadd.f32 %v519, %v521
        %v524 = vxor.u32 %v522, 2147483648
        %v525 = vxor.u32 %v523, 2147483648
        %v526 = vmul.f32 %v524, 1.442695
        %v527 = vpow.pop %v526
        %v528 = vmul.f32 %v525, 1.442695
        %v529 = vpow.pop %v528
        %v530 = vadd.f32 %v527, 1.0
        %v531 = vadd.f32 %v529, 1.0
        %v532 = vrcp.pop %v530
        %v533 = vmul.f32 1.0, %v532
        %v534 = vrcp.pop %v531
        %v535 = vmul.f32 1.0, %v534
        %v536 = vlaneseq
        %v537 = vshrl.u32 %v536, 7
        %v538 = vsub.s32 0, %v537
        %v539 = vrot.slane %v533, %v538
        %v540 = vlaneseq
        %v541 = vshrl.u32 %v540, 7
        %v542 = vsub.s32 0, %v541
        %v543 = vrot.slane %v535, %v542
        %v546 = vcombine.low %v539, %v543
        %v548 = vmul.f32 %v202, %v546
        %549 = vst [vmem:[%s201] sm:$0xff] %v548
        %s550 = sand.u32 %s98, 1
        %s551 = scalar_lea.sflag [#allocation5], %s550
        %s552 = sand.u32 %s98, 1
        %s553 = smul.addr %s552, 8
        %s554 = scalar_lea.vmem [#allocation8], %s553
        // Predicated region
        $region41: #{tpu_custom_call.1} parent=31 // pred_check
          %p555 = pneg %p108
        $region42: #{tpu_custom_call.1} parent=31 // pred_check_branch
          %557 = sbr.rel (%p555) target = $region44
        $region43: #{tpu_custom_call.1} parent=31 // pred_region
          %s559 = ssub.s32 128, 128
          %560 = vsyncadd %s551, %s559
          %s561 = smul.addr %s22, 2
          %s562 = smul.addr %s561, 64
          %s563 = scalar_lea.hbm %s3, %s562
          %s565 = sshll.u32 %s554, 4
          %s566 = int_to_ptr.vmem [resolvable:$true] %s565
          %568 = dma.vmem_to_hbm [thread:$0]  %s566, 128, %s563, %s551
        $region44: #{tpu_custom_call.1} parent=31 // pred_fallthru
          _
      $region32: #{tpu_custom_call.1} parent=5 // pred_fallthru
        _
      %p569 = scmp.le.s32.totalorder 2, %s17
      // Predicated region
      $region45: #{tpu_custom_call.1} parent=5 // pred_check
        %p570 = pneg %p569
      $region46: #{tpu_custom_call.1} parent=5 // pred_check_branch
        %572 = sbr.rel (%p570) target = $region48
      $region47: #{tpu_custom_call.1} parent=5 // pred_region
        %s573 = ssub.s32 %s17, 2
        // Predicated region
        $region49: #{tpu_custom_call.1} parent=47 // pred_check
          %p574 = pneg %p114
        $region50: #{tpu_custom_call.1} parent=47 // pred_check_branch
          %576 = sbr.rel (%p574) target = $region52
        $region51: #{tpu_custom_call.1} parent=47 // pred_region
          %s577 = sand.u32 %s99, 1
          %s578 = scalar_lea.sflag [#allocation5], %s577
          %s579 = sand.u32 %s99, 1
          %s580 = smul.addr %s579, 8
          %s581 = scalar_lea.vmem [#allocation8], %s580
          %582 = dma.done %s578, 128
        $region52: #{tpu_custom_call.1} parent=47 // pred_fallthru
          _
      $region48: #{tpu_custom_call.1} parent=5 // pred_fallthru
        _
    $region6: #{tpu_custom_call.1} parent=1 // loop_footer
      %s21 = sadd.s32 1, %s17
    $region7: #{tpu_custom_call.1} parent=1 // loop_footer_branch
      %16 = sbr.rel target = $region3
    $region8: #{tpu_custom_call.1} parent=1 // loop_exit
      _
    %583 = vsyncpa [#allocation4], 1
    %s584 = scalar_lea.sflag [#allocation4], 1
    %585 = vsyncpa %s584, 1
    %586 = vsyncpa [#allocation5], 1
    %s587 = scalar_lea.sflag [#allocation5], 1
    %588 = vsyncpa %s587, 1
    %589 = vsyncpa [#allocation6], 1
    %s590 = scalar_lea.sflag [#allocation6], 1
    %591 = vsyncpa %s590, 1

</llo_original>
